<compile_context>
chip_gen: v7x
topology: tpu7x:2x2x1
jax: 0.10.0
libtpu: 0.0.40
codegen_flags: <defaults>
</compile_context>

<pallas_src>
import jax
import jax.numpy as jnp
from jax.experimental import pallas as pl
from jax.experimental.pallas import tpu as pltpu

_VMEM_LIMIT_BYTES = 48 * 1024 * 1024        # safe on v5e/v6e (128 MiB) and v7x (64 MiB)
_DEFAULT_BLOCK_BUDGET = 4 * 1024 * 1024     # ~4 MiB blocks (amortizes ~0.35 us/step)
_DEFAULT_FAST_PATH_BYTES = 4 * 1024 * 1024  # f32 working-set cap for single-pass path


def _round_up(v, m):
    return ((v + m - 1) // m) * m


def _largest_divisor_leq(total, target, multiple=1):
    """Largest divisor of `total` that is a multiple of `multiple` and <= target (0 if none)."""
    target = min(total, target)
    d = (target // multiple) * multiple
    while d >= multiple:
        if total % d == 0:
            return d
        d -= multiple
    return 0


# --------------------------- kernels ----------------------------------------


def _stats_kernel(x_ref, sum_ref, sq_ref):
    # x_ref: (n_blk, C, hw_blk) native dtype.
    # sum_ref/sq_ref: (1, C, 1) f32 per-core partials, resident across the two
    # inner ("arbitrary") grid axes; initialized on each core's own first step.
    i = pl.program_id(1)
    j = pl.program_id(2)

    @pl.when(jnp.logical_and(i == 0, j == 0))
    def _init():
        sum_ref[...] = jnp.zeros_like(sum_ref)
        sq_ref[...] = jnp.zeros_like(sq_ref)

    xf = x_ref[...].astype(jnp.float32)               # upcast in-kernel only
    xs = jnp.sum(xf, axis=0)                          # (C, hw_blk)  sublane adds
    xq = jnp.sum(xf * xf, axis=0)
    sum_ref[...] += jnp.sum(xs, axis=-1, keepdims=True)[None]   # lane reduce
    sq_ref[...] += jnp.sum(xq, axis=-1, keepdims=True)[None]


def _apply_kernel(x_ref, scale_ref, offset_ref, o_ref):
    # out = scale_row * x + offset_row.  Native-dtype HBM I/O, f32 FMA.
    xf = x_ref[...].astype(jnp.float32)
    o_ref[...] = (xf * scale_ref[...] + offset_ref[...]).astype(o_ref.dtype)


def _fused_kernel(ab_ref, x_ref, gamma_ref, beta_ref, o_ref):
    # Single-pass fast path: whole (padded) activation resident in VMEM.
    a = ab_ref[0]
    b = ab_ref[1]
    eps = ab_ref[2]
    inv_m = ab_ref[3]                                  # 1/(N*H*W), true count
    xf = x_ref[...].astype(jnp.float32)                # (N, C, HWp)
    s = jnp.sum(jnp.sum(xf, axis=0), axis=-1, keepdims=True)[None]       # (1,C,1)
    q = jnp.sum(jnp.sum(xf * xf, axis=0), axis=-1, keepdims=True)[None]
    mean = s * inv_m
    var = q * inv_m - mean * mean                      # biased variance
    inv_std = jax.lax.rsqrt(var + eps)
    g = gamma_ref[...][None]                           # (1, C, 1)
    be = beta_ref[...][None]
    scale = a + b * g * inv_std
    offset = b * (be - g * mean * inv_std)
    o_ref[...] = (xf * scale + offset).astype(o_ref.dtype)


# --------------------------- wrapper -----------------------------------------


def adaptive_batch_norm_2d(x, a, b, gamma, beta, eps=1e-5, *,
                           block_budget_bytes=_DEFAULT_BLOCK_BUDGET,
                           fast_path_max_bytes=_DEFAULT_FAST_PATH_BYTES):
    """x: (N, C, H, W). a, b: scalars. gamma, beta: (C,). Output keeps x.dtype."""
    n, c, h, w = x.shape
    hw = h * w
    itemsize = jnp.dtype(x.dtype).itemsize
    sub = max(8, 32 // max(1, itemsize))     # sublane granularity: 8 f32, 16 bf16
    c_pad = _round_up(c, sub)                # sublane-aware C for VMEM accounting
    hw_pad = _round_up(hw, 128)

    a = jnp.asarray(a, jnp.float32).reshape(())
    b = jnp.asarray(b, jnp.float32).reshape(())
    gamma_f = jnp.asarray(gamma, jnp.float32).reshape(c)
    beta_f = jnp.asarray(beta, jnp.float32).reshape(c)
    inv_m = 1.0 / float(n * hw)              # true global count (padding-neutral)

    # Free, transpose-free views; pad HW once if not lane-aligned.
    x2 = x.reshape(n * c, hw)
    if hw_pad != hw:
        x2 = jnp.pad(x2, ((0, 0), (0, hw_pad - hw)))
    x3 = x2.reshape(n, c, hw_pad)

    # ---------------- fast path: whole activation fits comfortably in VMEM ---
    if n * c_pad * hw_pad * 4 <= fast_path_max_bytes:
        ab = jnp.stack([a, b, jnp.float32(eps), jnp.float32(inv_m)])
        out3 = pl.pallas_call(
            _fused_kernel,
            out_shape=jax.ShapeDtypeStruct((n, c, hw_pad), x.dtype),
            in_specs=[
                pl.BlockSpec(memory_space=pltpu.MemorySpace.SMEM),   # [a,b,eps,1/M]
                pl.BlockSpec(memory_space=pltpu.MemorySpace.VMEM),   # x
                pl.BlockSpec(memory_space=pltpu.MemorySpace.VMEM),   # gamma (C,1)
                pl.BlockSpec(memory_space=pltpu.MemorySpace.VMEM),   # beta  (C,1)
            ],
            out_specs=pl.BlockSpec(memory_space=pltpu.MemorySpace.VMEM),
            compiler_params=pltpu.CompilerParams(
                vmem_limit_bytes=_VMEM_LIMIT_BYTES),
            cost_estimate=pl.CostEstimate(
                flops=int(5 * n * c * hw), transcendentals=int(c),
                bytes_accessed=int(2 * n * c * hw * itemsize)),
        )(ab, x3, gamma_f.reshape(c, 1), beta_f.reshape(c, 1))
        out2 = out3.reshape(n * c, hw_pad)
        if hw_pad != hw:
            out2 = out2[:, :hw]
        return out2.reshape(n, c, h, w)

    # ---------------- pass 1: per-channel partial sums -----------------------
    hw_target1 = max(128, (block_budget_bytes // (c_pad * itemsize)) // 128 * 128)
    hw_blk = _largest_divisor_leq(hw_pad, hw_target1, 128)
    n_blk = _largest_divisor_leq(
        n, max(1, block_budget_bytes // (c_pad * hw_blk * itemsize))) or 1
    n_steps = n // n_blk
    hw_steps = hw_pad // hw_blk

    # Split one reduction axis across a leading "parallel" axis of size 2 when
    # possible: on v7x each TensorCore accumulates its own partial block.
    if hw_steps % 2 == 0 and hw_steps >= 2:
        p_dim, inner_n, inner_hw = 2, n_steps, hw_steps // 2
        x_map = lambda p, i, j, IH=inner_hw: (i, 0, p * IH + j)
    elif n_steps % 2 == 0 and n_steps >= 2:
        p_dim, inner_n, inner_hw = 2, n_steps // 2, hw_steps
        x_map = lambda p, i, j, IN=inner_n: (p * IN + i, 0, j)
    else:
        p_dim, inner_n, inner_hw = 1, n_steps, hw_steps
        x_map = lambda p, i, j: (i, 0, j)

    part_spec = pl.BlockSpec((1, c, 1), lambda p, i, j: (p, 0, 0))
    sums, sqs = pl.pallas_call(
        _stats_kernel,
        out_shape=(jax.ShapeDtypeStruct((p_dim, c, 1), jnp.float32),
                   jax.ShapeDtypeStruct((p_dim, c, 1), jnp.float32)),
        grid=(p_dim, inner_n, inner_hw),
        in_specs=[pl.BlockSpec((n_blk, c, hw_blk), x_map)],
        out_specs=(part_spec, part_spec),
        compiler_params=pltpu.CompilerParams(
            dimension_semantics=("parallel", "arbitrary", "arbitrary"),
            vmem_limit_bytes=_VMEM_LIMIT_BYTES),
        cost_estimate=pl.CostEstimate(
            flops=int(3 * n * c * hw), transcendentals=0,
            bytes_accessed=int(n * c * hw * itemsize + 8 * p_dim * c)),
    )(x3)

    # Tiny per-channel fold (C elements) - negligible XLA work.
    total_sum = jnp.sum(sums, axis=0).reshape(c)
    total_sq = jnp.sum(sqs, axis=0).reshape(c)
    mean = total_sum * inv_m
    var = total_sq * inv_m - mean * mean               # biased variance
    inv_std = jax.lax.rsqrt(var + jnp.float32(eps))
    scale = a + b * gamma_f * inv_std
    offset = b * (beta_f - gamma_f * mean * inv_std)
    rows = n * c
    scale_r = jnp.broadcast_to(scale.reshape(1, c), (n, c)).reshape(rows, 1)
    offset_r = jnp.broadcast_to(offset.reshape(1, c), (n, c)).reshape(rows, 1)

    # ---------------- pass 2: out = scale_row * x + offset_row ---------------
    r_cap = max(1, block_budget_bytes // (128 * itemsize))
    if rows <= r_cap:
        r_blk = rows                                    # full dim -> always legal
    else:
        r_blk = _largest_divisor_leq(rows, r_cap, sub) or rows
    hw_target2 = max(128, (block_budget_bytes //
                           (_round_up(r_blk, sub) * itemsize)) // 128 * 128)
    hw_blk2 = _largest_divisor_leq(hw_pad, hw_target2, 128)

    x_spec2 = pl.BlockSpec((r_blk, hw_blk2), lambda i, j: (i, j))
    rc_spec = pl.BlockSpec((r_blk, 1), lambda i, j: (i, 0))
    # (If x is dead after this call, input_output_aliases={0: 0} would let the
    #  output reuse x's HBM buffer; not applied here since x may be live.)
    out2 = pl.pallas_call(
        _apply_kernel,
        out_shape=jax.ShapeDtypeStruct((rows, hw_pad), x.dtype),
        grid=(rows // r_blk, hw_pad // hw_blk2),
        in_specs=[x_spec2, rc_spec, rc_spec],
        out_specs=x_spec2,
        compiler_params=pltpu.CompilerParams(
            dimension_semantics=("parallel", "parallel"),
            vmem_limit_bytes=_VMEM_LIMIT_BYTES),
        cost_estimate=pl.CostEstimate(
            flops=int(2 * n * c * hw), transcendentals=0,
            bytes_accessed=int(2 * n * c * hw * itemsize)),
    )(x2, scale_r, offset_r)

    if hw_pad != hw:
        out2 = out2[:, :hw]
    return out2.reshape(n, c, h, w)


def _reference(x, a, b, gamma, beta, eps=1e-5):
    # Pure-JAX reference of the PyTorch forward (training-mode BN).
    mean = jnp.mean(x, axis=(0, 2, 3), keepdims=True)
    var = jnp.mean((x - mean) ** 2, axis=(0, 2, 3), keepdims=True)
    bn = (x - mean) / jnp.sqrt(var + eps)
    bn = bn * gamma.reshape(1, -1, 1, 1) + beta.reshape(1, -1, 1, 1)
    return a * x + b * bn


if __name__ == "__main__":
    key = jax.random.PRNGKey(0)
    N, C, H, W = 2, 4, 16, 16
    x = jax.random.normal(key, (N, C, H, W), dtype=jnp.float32)

    # Parameter init matching the module's __init__ (a=1, b=0, affine identity).
    a = jnp.float32(1.0)
    b = jnp.float32(0.0)
    gamma = jnp.ones((C,), jnp.float32)
    beta = jnp.zeros((C,), jnp.float32)

    out = adaptive_batch_norm_2d(x, a, b, gamma, beta)        # fast path
    out = jax.block_until_ready(out)
    ref = _reference(x, a, b, gamma, beta)
    assert out.shape == (N, C, H, W)
    assert jnp.allclose(out, ref, atol=1e-5, rtol=1e-5)

    # Non-trivial a/b/gamma/beta, still on the fused fast path.
    ka, kb = jax.random.split(key)
    a2 = jnp.float32(0.7)
    b2 = jnp.float32(1.3)
    gamma2 = jax.random.normal(ka, (C,), jnp.float32)
    beta2 = jax.random.normal(kb, (C,), jnp.float32)
    out1b = adaptive_batch_norm_2d(x, a2, b2, gamma2, beta2)
    out1b = jax.block_until_ready(out1b)
    assert jnp.allclose(out1b, _reference(x, a2, b2, gamma2, beta2),
                        atol=1e-4, rtol=1e-4)

    # Force the tiled two-pass path: multi-step grid + 2-way core split (P=2).
    out2 = adaptive_batch_norm_2d(x, a2, b2, gamma2, beta2,
                                  block_budget_bytes=4096,
                                  fast_path_max_bytes=0)
    out2 = jax.block_until_ready(out2)
    assert jnp.allclose(out2, _reference(x, a2, b2, gamma2, beta2),
                        atol=1e-4, rtol=1e-4)

    # Non-128-divisible spatial size (10x10=100) -> lane-padded tiled path.
    xs = jax.random.normal(key, (N, C, 10, 10), dtype=jnp.float32)
    out3 = adaptive_batch_norm_2d(xs, a2, b2, gamma2, beta2,
                                  block_budget_bytes=4096,
                                  fast_path_max_bytes=0)
    out3 = jax.block_until_ready(out3)
    assert jnp.allclose(out3, _reference(xs, a2, b2, gamma2, beta2),
                        atol=1e-4, rtol=1e-4)

    # Native bf16 HBM I/O end-to-end (casting happens only inside the kernels).
    xb = x.astype(jnp.bfloat16)
    outb = adaptive_batch_norm_2d(xb, a2, b2, gamma2, beta2,
                                  block_budget_bytes=4096,
                                  fast_path_max_bytes=0)
    outb = jax.block_until_ready(outb)
    assert outb.dtype == jnp.bfloat16
    refb = _reference(xb.astype(jnp.float32), a2, b2, gamma2, beta2)
    assert jnp.allclose(outb.astype(jnp.float32), refb, atol=6e-2, rtol=3e-2)

    print("KERNEL_OK")
</pallas_src>

<mosaic_0001>
module attributes {stable_mosaic.version = 11 : i64} {
  func.func @_fused_kernel(%arg0: memref<4xf32, #tpu.memory_space<smem>>, %arg1: memref<2x4x256xf32, #tpu.memory_space<vmem>>, %arg2: memref<4x1xf32, #tpu.memory_space<vmem>>, %arg3: memref<4x1xf32, #tpu.memory_space<vmem>>, %arg4: memref<2x4x256xf32, #tpu.memory_space<vmem>>) attributes {dimension_semantics = [], scalar_prefetch = 0 : i64, scratch_operands = 0 : i64, tpu.core_type = #tpu.core_type<tc>} {
    %c0 = arith.constant 0 : index
    %0 = memref.load %arg0[%c0] : memref<4xf32, #tpu.memory_space<smem>>
    %c1 = arith.constant 1 : index
    %1 = memref.load %arg0[%c1] : memref<4xf32, #tpu.memory_space<smem>>
    %c2 = arith.constant 2 : index
    %2 = memref.load %arg0[%c2] : memref<4xf32, #tpu.memory_space<smem>>
    %c3 = arith.constant 3 : index
    %3 = memref.load %arg0[%c3] : memref<4xf32, #tpu.memory_space<smem>>
    %c0_0 = arith.constant 0 : index
    %c0_1 = arith.constant 0 : index
    %c0_2 = arith.constant 0 : index
    %4 = vector.load %arg1[%c0_0, %c0_1, %c0_2] : memref<2x4x256xf32, #tpu.memory_space<vmem>>, vector<2x4x256xf32>
    %cst = arith.constant dense<0.000000e+00> : vector<4x256xf32>
    %5 = vector.multi_reduction <add>, %4, %cst [0] : vector<2x4x256xf32> to vector<4x256xf32>
    %cst_3 = arith.constant dense<0.000000e+00> : vector<4xf32>
    %6 = vector.multi_reduction <add>, %5, %cst_3 [1] : vector<4x256xf32> to vector<4xf32>
    %7 = vector.shape_cast %6 : vector<4xf32> to vector<4x1xf32>
    %8 = vector.shape_cast %7 : vector<4x1xf32> to vector<1x4x1xf32>
    %9 = arith.mulf %4, %4 : vector<2x4x256xf32>
    %cst_4 = arith.constant dense<0.000000e+00> : vector<4x256xf32>
    %10 = vector.multi_reduction <add>, %9, %cst_4 [0] : vector<2x4x256xf32> to vector<4x256xf32>
    %cst_5 = arith.constant dense<0.000000e+00> : vector<4xf32>
    %11 = vector.multi_reduction <add>, %10, %cst_5 [1] : vector<4x256xf32> to vector<4xf32>
    %12 = vector.shape_cast %11 : vector<4xf32> to vector<4x1xf32>
    %13 = vector.shape_cast %12 : vector<4x1xf32> to vector<1x4x1xf32>
    %14 = vector.broadcast %3 : f32 to vector<1x4x1xf32>
    %15 = arith.mulf %8, %14 : vector<1x4x1xf32>
    %16 = vector.broadcast %3 : f32 to vector<1x4x1xf32>
    %17 = arith.mulf %13, %16 : vector<1x4x1xf32>
    %18 = arith.mulf %15, %15 : vector<1x4x1xf32>
    %19 = arith.subf %17, %18 : vector<1x4x1xf32>
    %20 = vector.broadcast %2 : f32 to vector<1x4x1xf32>
    %21 = arith.addf %19, %20 : vector<1x4x1xf32>
    %22 = math.rsqrt %21 : vector<1x4x1xf32>
    %c0_6 = arith.constant 0 : index
    %c0_7 = arith.constant 0 : index
    %23 = vector.load %arg2[%c0_6, %c0_7] : memref<4x1xf32, #tpu.memory_space<vmem>>, vector<4x1xf32>
    %24 = vector.shape_cast %23 : vector<4x1xf32> to vector<1x4x1xf32>
    %c0_8 = arith.constant 0 : index
    %c0_9 = arith.constant 0 : index
    %25 = vector.load %arg3[%c0_8, %c0_9] : memref<4x1xf32, #tpu.memory_space<vmem>>, vector<4x1xf32>
    %26 = vector.shape_cast %25 : vector<4x1xf32> to vector<1x4x1xf32>
    %27 = vector.broadcast %1 : f32 to vector<1x4x1xf32>
    %28 = arith.mulf %27, %24 : vector<1x4x1xf32>
    %29 = arith.mulf %28, %22 : vector<1x4x1xf32>
    %30 = vector.broadcast %0 : f32 to vector<1x4x1xf32>
    %31 = arith.addf %30, %29 : vector<1x4x1xf32>
    %32 = arith.mulf %24, %15 : vector<1x4x1xf32>
    %33 = arith.mulf %32, %22 : vector<1x4x1xf32>
    %34 = arith.subf %26, %33 : vector<1x4x1xf32>
    %35 = vector.broadcast %1 : f32 to vector<1x4x1xf32>
    %36 = arith.mulf %35, %34 : vector<1x4x1xf32>
    %37 = vector.broadcast %31 : vector<1x4x1xf32> to vector<2x4x256xf32>
    %38 = arith.mulf %4, %37 : vector<2x4x256xf32>
    %39 = vector.broadcast %36 : vector<1x4x1xf32> to vector<2x4x256xf32>
    %40 = arith.addf %38, %39 : vector<2x4x256xf32>
    %c0_10 = arith.constant 0 : index
    %c0_11 = arith.constant 0 : index
    %c0_12 = arith.constant 0 : index
    %41 = vector.load %arg4[%c0_10, %c0_11, %c0_12] : memref<2x4x256xf32, #tpu.memory_space<vmem>>, vector<2x4x256xf32>
    tpu.vector_store %arg4[%c0_10, %c0_11, %c0_12], %40 {strides = array<i32>} : memref<2x4x256xf32, #tpu.memory_space<vmem>>, vector<2x4x256xf32>,
    return
  }
}

</mosaic_0001>

<llo_original>
// kernel: tpu_custom_call.1
$region0: #{tpu_custom_call.1}
  #allocation0 [shape = 'u32[]', space=smem, size = 0x4, offset = 0x4, fixed_abs, tag = 'smem constant byte address 0x4 - core index']
  #allocation1 [shape = 'u32[144,128]{1,0:T(1,128)}', space=vmem, size = 0x12000, scoped, tag = 'internal scratch']
  %s0 = inlined_call_operand.vmem [shape: f32[4], index: 0, kind: input, shape index: {}]
  %s1 = inlined_call_operand.hbm [shape: f32[2,4,256], index: 1, kind: input, shape index: {}]
  %s2 = inlined_call_operand.vmem [shape: f32[4,1], index: 2, kind: input, shape index: {}]
  %s3 = inlined_call_operand.vmem [shape: f32[4,1], index: 3, kind: input, shape index: {}]
  %s4 = inlined_call_operand.hbm [shape: f32[2,4,256], index: 4, kind: output, shape index: {}]
  %s5 = sld [smem:[#allocation0]]
  $region34: #{tpu_custom_call.1} parent=0
    _
  %s7 = ssub.s32 1, %s5
  %s8 = scalar_select 0, %s7, %s5
  $region1: #{tpu_custom_call.1} parent=0
    #allocation2 [shape = 'u8[512]{0}', space=smem, size = 0x200, scoped, tag = 'input window, operand 0, single buffered']
    #allocation3 [shape = 's32[1]{0}', space=sflag, size = 0x4, scoped, tag = 'scoped memory for tpu_custom_call.1']
    #allocation4 [shape = 's32[1]{0}', space=sflag, size = 0x4, scoped, tag = 'scoped memory for tpu_custom_call.1']
    #allocation5 [shape = 's32[1]{0}', space=sflag, size = 0x4, scoped, tag = 'scoped memory for tpu_custom_call.1']
    #allocation6 [shape = 'u8[8192]{0}', space=vmem, size = 0x2000, scoped, tag = 'input window, operand 1, single buffered']
    #allocation7 [shape = 'u8[8192]{0}', space=vmem, size = 0x2000, scoped, tag = 'output window, operand 0, single buffered']
    %9 = vsyncpa [#allocation5], 0
    %10 = vsyncpa [#allocation3], 0
    %11 = vsyncpa [#allocation4], 0
    // Predicated region
    $region2: #{tpu_custom_call.1} parent=1 // pred_check
      _
    $region3: #{tpu_custom_call.1} parent=1 // pred_check_branch
      %13 = sbr.rel (0) target = $region5
    $region4: #{tpu_custom_call.1} parent=1 // pred_region
      %s15 = ssub.s32 16, 16
      %16 = vsyncadd [#allocation5], %s15
      %s18 = sshll.u32 %s0, 4
      %s19 = int_to_ptr.vmem [resolvable:$true] %s18
      %21 = dma.vmem_to_smem %s19, 16, [#allocation2], [#allocation5]
    $region5: #{tpu_custom_call.1} parent=1 // pred_fallthru
      _
    // Predicated region
    $region6: #{tpu_custom_call.1} parent=1 // pred_check
      _
    $region7: #{tpu_custom_call.1} parent=1 // pred_check_branch
      %23 = sbr.rel (0) target = $region9
    $region8: #{tpu_custom_call.1} parent=1 // pred_region
      %s25 = ssub.s32 256, 256
      %26 = vsyncadd [#allocation3], %s25
      %s27 = sshll.u32 [#allocation6], 4
      %s28 = int_to_ptr.vmem [resolvable:$true] %s27
      %33 = dma.hbm_to_vmem [thread:$0]  %s1, 256, %s28, [#allocation3], 128, 128, 8
    $region9: #{tpu_custom_call.1} parent=1 // pred_fallthru
      _
    // Predicated region
    $region10: #{tpu_custom_call.1} parent=1 // pred_check
      _
    $region11: #{tpu_custom_call.1} parent=1 // pred_check_branch
      %35 = sbr.rel (0) target = $region13
    $region12: #{tpu_custom_call.1} parent=1 // pred_region
      _
    $region13: #{tpu_custom_call.1} parent=1 // pred_fallthru
      _
    // Predicated region
    $region14: #{tpu_custom_call.1} parent=1 // pred_check
      _
    $region15: #{tpu_custom_call.1} parent=1 // pred_check_branch
      %37 = sbr.rel (0) target = $region17
    $region16: #{tpu_custom_call.1} parent=1 // pred_region
      _
    $region17: #{tpu_custom_call.1} parent=1 // pred_fallthru
      _
    // Predicated region
    $region18: #{tpu_custom_call.1} parent=1 // pred_check
      _
    $region19: #{tpu_custom_call.1} parent=1 // pred_check_branch
      %39 = sbr.rel (0) target = $region21
    $region20: #{tpu_custom_call.1} parent=1 // pred_region
      %40 = dma.done [#allocation5], 16
    $region21: #{tpu_custom_call.1} parent=1 // pred_fallthru
      _
    // Predicated region
    $region22: #{tpu_custom_call.1} parent=1 // pred_check
      _
    $region23: #{tpu_custom_call.1} parent=1 // pred_check_branch
      %42 = sbr.rel (0) target = $region25
    $region24: #{tpu_custom_call.1} parent=1 // pred_region
      %43 = dma.done [#allocation3], 256
    $region25: #{tpu_custom_call.1} parent=1 // pred_fallthru
      _
    %44 = sfence
    %s45 = sld [smem:[#allocation2]]
    %s46 = sld [smem:[#allocation2 + $0x1]]
    %s47 = sld [smem:[#allocation2 + $0x2]]
    %s48 = sld [smem:[#allocation2 + $0x3]]
    %v49 = vld [vmem:[#allocation6] sm:$0xff]
    %v50 = vld [vmem:[#allocation6 + $0x8] sm:$0xff]
    %v53 = vcombine.high %v49, %v49
    %v54 = vcombine.high %v50, %v50
    %vm57 = vcmask 1043456
    %v58 = vsel %vm57, %v49, 0.0
    %v59 = vsel %vm57, %v50, 0.0
    %v60 = vadd.f32 %v58, %v59
    %v61 = vsel %vm57, %v53, 0.0
    %v62 = vsel %vm57, %v54, 0.0
    %v63 = vadd.f32 %v61, %v62
    %v64 = vsel %vm57, %v60, 0.0
    %v65 = vsel %vm57, %v63, 0.0
    %v66 = vadd.f32 %v64, %v65
    %67 = vadd.xlane.f32.xlu0 %v66
    %v68 = vpop.xlane.xlu0 %67
    %v69 = vmul.f32 %v49, %v49
    %v70 = vmul.f32 %v50, %v50
    %v73 = vcombine.high %v69, %v69
    %v74 = vcombine.high %v70, %v70
    %v77 = vsel %vm57, %v69, 0.0
    %v78 = vsel %vm57, %v70, 0.0
    %v79 = vadd.f32 %v77, %v78
    %v80 = vsel %vm57, %v73, 0.0
    %v81 = vsel %vm57, %v74, 0.0
    %v82 = vadd.f32 %v80, %v81
    %v83 = vsel %vm57, %v79, 0.0
    %v84 = vsel %vm57, %v82, 0.0
    %v85 = vadd.f32 %v83, %v84
    %86 = vadd.xlane.f32.xlu0 %v85
    %v87 = vpop.xlane.xlu0 %86
    %v88 = vstv %s48
    %v89 = vmul.f32 %v68, %v88
    %v90 = vmul.f32 %v87, %v88
    %v91 = vmul.f32 %v89, %v89
    %v92 = vsub.f32 %v90, %v91
    %v93 = vstv %s47
    %v94 = vadd.f32 %v92, %v93
    %v95 = vrsqrt.pop %v94
    %v96 = vld [vmem:[%s2] sm:$0xf]
    %v97 = vld [vmem:[%s3] sm:$0xf]
    %v98 = vstv %s46
    %v99 = vmul.f32 %v98, %v96
    %v100 = vmul.f32 %v99, %v95
    %v101 = vstv %s45
    %v102 = vadd.f32 %v101, %v100
    %v103 = vmul.f32 %v96, %v89
    %v104 = vmul.f32 %v103, %v95
    %v105 = vsub.f32 %v97, %v104
    %v106 = vmul.f32 %v98, %v105
    %108 = vset.pattern.permute.xlu0 0
    %109 = vperm.xlu0 %108, %v102
    %v110 = vpop.permute.xlu0 %109
    %v112 = vunpack.c.l.s4 839922192
    %v113 = vunpack.c.0.s8 %v112
    %v114 = vlaneseq
    %v115 = vshrl.u32 %v114, 7
    %v116 = vsub.s32 %v113, %v115
    %v117 = vrot.slane %v110, %v116
    %v119 = vmul.f32 %v49, %v117
    %v120 = vmul.f32 %v50, %v117
    %122 = vset.pattern.permute.xlu0 0
    %123 = vperm.xlu0 %122, %v106
    %v124 = vpop.permute.xlu0 %123
    %v126 = vunpack.c.l.s4 839922192
    %v127 = vunpack.c.0.s8 %v126
    %v128 = vlaneseq
    %v129 = vshrl.u32 %v128, 7
    %v130 = vsub.s32 %v127, %v129
    %v131 = vrot.slane %v124, %v130
    %v133 = vadd.f32 %v119, %v131
    %v134 = vadd.f32 %v120, %v131
    %135 = vst [vmem:[#allocation7] sm:$0xff] %v133
    %136 = vst [vmem:[#allocation7 + $0x8] sm:$0xff] %v134
    // Predicated region
    $region26: #{tpu_custom_call.1} parent=1 // pred_check
      _
    $region27: #{tpu_custom_call.1} parent=1 // pred_check_branch
      %138 = sbr.rel (0) target = $region29
    $region28: #{tpu_custom_call.1} parent=1 // pred_region
      %s140 = ssub.s32 256, 256
      %141 = vsyncadd [#allocation4], %s140
      %s142 = sshll.u32 [#allocation7], 4
      %s143 = int_to_ptr.vmem [resolvable:$true] %s142
      %148 = dma.vmem_to_hbm [thread:$0]  %s143, 256, %s4, [#allocation4], 128, 128, 8
    $region29: #{tpu_custom_call.1} parent=1 // pred_fallthru
      _
    // Predicated region
    $region30: #{tpu_custom_call.1} parent=1 // pred_check
      _
    $region31: #{tpu_custom_call.1} parent=1 // pred_check_branch
      %150 = sbr.rel (0) target = $region33
    $region32: #{tpu_custom_call.1} parent=1 // pred_region
      %151 = dma.done [#allocation4], 256
    $region33: #{tpu_custom_call.1} parent=1 // pred_fallthru
      _
    %152 = vsyncpa [#allocation3], 1
    %153 = vsyncpa [#allocation4], 1
    %154 = vsyncpa [#allocation5], 1

</llo_original>
